<compile_context>
chip_gen: v7x
topology: tpu7x:2x2x1
jax: 0.10.0
libtpu: 0.0.40
codegen_flags: <defaults>
</compile_context>

<pallas_src>
import jax
import jax.numpy as jnp
from jax.experimental import pallas as pl
from jax.experimental.pallas import tpu as pltpu


def _temporal_attention_kernel(x_ref, w_ref, v_ref, ctx_ref, attw_ref):
    # x_ref   : (BB, T, D)   batch block, native dtype (f32 or bf16)
    # w_ref   : (D, A)       full W, resident (constant index_map)
    # v_ref   : (1, A)       lane-dense row of v, resident
    # ctx_ref : (BB, 1, D)   context output block (x.dtype)
    # attw_ref: (BB, T, 1)   attention-weight output block (always f32)
    BB, T, D = x_ref.shape
    A = w_ref.shape[1]

    x = x_ref[...]                                   # native dtype
    w = w_ref[...]
    v_row = v_ref[...].astype(jnp.float32)           # (1, A)

    # attention_scores = tanh(x @ W): one MXU matmul over the whole batch
    # block with f32 accumulation (MXU kept: kernel is HBM-bound at these
    # A/D so the matmul is hidden; the collapse is only done when layout-free).
    if T % 8 == 0:
        scores2 = jnp.tanh(
            jnp.dot(x.reshape(BB * T, D), w,
                    preferred_element_type=jnp.float32))          # (BB*T, A)
        sv = (scores2 * v_row).reshape(BB, T, A)                   # (BB, T, A)
    else:
        # Fallback: avoid an unaligned (BB,T)->(BB*T) relayout; batched einsum
        # (same validated pattern as flash-attention's 'bqd,bkd->bqk').
        scores3 = jnp.tanh(
            jnp.einsum("btd,bda->bta", x,
                       jnp.broadcast_to(w, (BB,) + w.shape),
                       preferred_element_type=jnp.float32))        # (BB, T, A)
        sv = scores3 * v_row

    # logits = scores @ v with output width 1 -> VPU multiply + lane reduce
    # (no 1-column MXU matmul).  Keep T on sublanes from here on.
    logits = jnp.sum(sv, axis=-1, keepdims=True)                   # (BB, T, 1)

    # Numerically stable softmax over the time axis.
    m = jnp.max(logits, axis=1, keepdims=True)                     # (BB, 1, 1)
    e = jnp.exp(logits - m)                                        # (BB, T, 1)
    denom = jnp.sum(e, axis=1, keepdims=True)                      # (BB, 1, 1)
    inv = pl.reciprocal(denom, approx=True)                        # EUP vrcp
    inv = inv * (2.0 - denom * inv)                                # Newton -> f32
    weights = e * inv                                              # (BB, T, 1) f32

    # context[b, d] = sum_t weights[b, t] * x[b, t, d]
    # VPU weighted sum: cast the small weights to x.dtype (not x to f32),
    # accumulate in f32.
    context = jnp.sum(weights.astype(x.dtype) * x, axis=1,
                      keepdims=True, dtype=jnp.float32)            # (BB, 1, D)

    ctx_ref[...] = context.astype(ctx_ref.dtype)
    attw_ref[...] = weights.astype(attw_ref.dtype)


def _device_kind():
    try:
        return jax.devices()[0].device_kind.lower()
    except Exception:
        return ""


def _choose_block_b(B, cap):
    """Largest divisor of B that fits the byte/VMEM cap; prefer sublane-aligned
    blocks (multiple of 8 or the whole batch) and >= 2 grid steps (v7x has two
    TensorCores)."""
    divisors = [d for d in range(1, B + 1) if B % d == 0]
    aligned = [d for d in divisors if d % 8 == 0 or d == B]
    for pool in (
        [d for d in aligned if d <= cap and B // d >= 2],
        [d for d in aligned if d <= cap],
        [d for d in divisors if d <= cap and B // d >= 2],
        [d for d in divisors if d <= cap],
        divisors,
    ):
        if pool:
            return max(pool)
    return 1


def temporal_attention(x, w_mat, v_mat, *, block_b=None):
    """x: (B, T, D); w_mat: (D, A); v_mat: (A, 1). Returns (context, weights)."""
    B, T, D = x.shape
    A = w_mat.shape[1]
    itemsize = jnp.dtype(x.dtype).itemsize

    # Per-generation byte targets (amortize ~0.35us/step pipeline overhead) and
    # VMEM budgets (v7x has only 64 MiB physical VMEM per TensorCore).
    kind = _device_kind()
    if ("v7" in kind) or ("7x" in kind):
        target_tile_bytes, vmem_budget = 4 << 20, 44 << 20
    elif "v6" in kind:
        target_tile_bytes, vmem_budget = 2 << 20, 96 << 20
    elif "v5" in kind:
        target_tile_bytes, vmem_budget = 1 << 20, 96 << 20
    else:
        target_tile_bytes, vmem_budget = 2 << 20, 44 << 20

    # Rough per-batch-element VMEM footprint: double-buffered x tile, f32
    # score/weight intermediates, double-buffered outputs.
    per_b_x = T * D * itemsize
    per_b_vmem = (2 * per_b_x
                  + 2 * T * max(A, 8) * 4
                  + T * D * 4
                  + 2 * (D + T) * 4)
    resident = 2 * D * A * itemsize + 2 * A * 4      # W and v (resident)

    if block_b is None:
        cap = max(1, min(target_tile_bytes // max(1, per_b_x),
                         (vmem_budget // 2 - resident) // max(1, per_b_vmem)))
        block_b = _choose_block_b(B, int(cap))
    assert B % block_b == 0, "block_b must divide the batch size"
    # TODO(synk): pad/mask a final partial block instead of falling back to
    # tiny divisors for odd/prime batch sizes.
    grid = (B // block_b,)

    vmem_limit = int(min(vmem_budget,
                         max(32 << 20, 2 * (resident + block_b * per_b_vmem))))

    v_row = v_mat.reshape(1, A)   # lane-dense (1, A) row for the VPU reduce

    cost = pl.CostEstimate(
        flops=2 * B * T * D * A + 2 * B * T * A + 2 * B * T * D,
        transcendentals=B * T * A + B * T,          # tanh + exp
        bytes_accessed=(B * T * D * itemsize
                        + D * A * itemsize + A * itemsize
                        + B * D * itemsize + B * T * 4),
    )

    grid_spec = pltpu.PrefetchScalarGridSpec(
        num_scalar_prefetch=0,
        grid=grid,
        in_specs=[
            pl.BlockSpec((block_b, T, D), lambda b: (b, 0, 0)),   # x batch block
            pl.BlockSpec((D, A), lambda b: (0, 0)),               # W (resident)
            pl.BlockSpec((1, A), lambda b: (0, 0)),               # v row (resident)
        ],
        out_specs=[
            pl.BlockSpec((block_b, 1, D), lambda b: (b, 0, 0)),    # context rows
            pl.BlockSpec((block_b, T, 1), lambda b: (b, 0, 0)),    # attention rows
        ],
    )

    ctx3, attw3 = pl.pallas_call(
        _temporal_attention_kernel,
        grid_spec=grid_spec,
        out_shape=(
            jax.ShapeDtypeStruct((B, 1, D), x.dtype),
            jax.ShapeDtypeStruct((B, T, 1), jnp.float32),   # weights stay f32
        ),
        compiler_params=pltpu.CompilerParams(
            dimension_semantics=("parallel",),   # megacore-shard the batch axis
            vmem_limit_bytes=vmem_limit,
        ),
        cost_estimate=cost,
    )(x, w_mat, v_row)

    return ctx3.reshape(B, D), attw3.reshape(B, T)


def temporal_attention_ref(x, w_mat, v_mat):
    scores = jnp.tanh(jnp.einsum("btd,da->bta", x, w_mat))
    logits = jnp.einsum("bta,ao->bto", scores, v_mat)          # (B, T, 1)
    weights = jax.nn.softmax(logits, axis=1)                   # softmax over time
    context = jnp.sum(weights * x, axis=1)                     # (B, D)
    return context, weights[..., 0]


if __name__ == "__main__":
    B, T, D, A = 2, 8, 32, 16

    key = jax.random.PRNGKey(0)
    kx, kw, kv = jax.random.split(key, 3)
    x = jax.random.normal(kx, (B, T, D), dtype=jnp.float32)
    # Deterministic synthetic parameters (nn.Linear weights, no bias).
    w_mat = (jax.random.normal(kw, (D, A), dtype=jnp.float32)
             / jnp.sqrt(jnp.float32(D)))
    v_mat = (jax.random.normal(kv, (A, 1), dtype=jnp.float32)
             / jnp.sqrt(jnp.float32(A)))

    ctx, attw = temporal_attention(x, w_mat, v_mat)
    jax.block_until_ready((ctx, attw))

    ctx_ref, attw_ref = temporal_attention_ref(x, w_mat, v_mat)
    assert ctx.shape == (B, D) and attw.shape == (B, T)
    assert jnp.allclose(ctx, ctx_ref, atol=1e-5, rtol=1e-5)
    assert jnp.allclose(attw, attw_ref, atol=1e-5, rtol=1e-5)
    assert jnp.allclose(jnp.sum(attw, axis=1), 1.0, atol=1e-5)

    print("KERNEL_OK")
</pallas_src>

<mosaic_0001>
module attributes {stable_mosaic.version = 11 : i64} {
  func.func @_temporal_attention_kernel(%arg0: i32, %arg1: memref<2x8x32xf32, #tpu.memory_space<vmem>>, %arg2: memref<32x16xf32, #tpu.memory_space<vmem>>, %arg3: memref<1x16xf32, #tpu.memory_space<vmem>>, %arg4: memref<2x1x32xf32, #tpu.memory_space<vmem>>, %arg5: memref<2x8x1xf32, #tpu.memory_space<vmem>>) attributes {dimension_semantics = [#tpu.dimension_semantics<parallel>], iteration_bounds = array<i64: 1>, scalar_prefetch = 0 : i64, scratch_operands = 0 : i64, tpu.core_type = #tpu.core_type<tc>, window_params = [{transform_indices = @transform_0, window_bounds = array<i64: 2, 8, 32>}, {pipeline_mode = #tpu.pipeline_mode<synchronous>, transform_indices = @transform_1, window_bounds = array<i64: 32, 16>}, {pipeline_mode = #tpu.pipeline_mode<synchronous>, transform_indices = @transform_2, window_bounds = array<i64: 1, 16>}, {transform_indices = @transform_3, window_bounds = array<i64: 2, 1, 32>}, {transform_indices = @transform_4, window_bounds = array<i64: 2, 8, 1>}]} {
    %c0 = arith.constant 0 : index
    %c0_0 = arith.constant 0 : index
    %c0_1 = arith.constant 0 : index
    %0 = vector.load %arg1[%c0, %c0_0, %c0_1] : memref<2x8x32xf32, #tpu.memory_space<vmem>>, vector<2x8x32xf32>
    %c0_2 = arith.constant 0 : index
    %c0_3 = arith.constant 0 : index
    %1 = vector.load %arg2[%c0_2, %c0_3] : memref<32x16xf32, #tpu.memory_space<vmem>>, vector<32x16xf32>
    %c0_4 = arith.constant 0 : index
    %c0_5 = arith.constant 0 : index
    %2 = vector.load %arg3[%c0_4, %c0_5] : memref<1x16xf32, #tpu.memory_space<vmem>>, vector<1x16xf32>
    %3 = vector.shape_cast %0 : vector<2x8x32xf32> to vector<16x32xf32>
    %cst = arith.constant dense<0.000000e+00> : vector<16x16xf32>
    %4 = tpu.matmul %3, %1, %cst {dimension_numbers = #tpu.dot_dimension_numbers<[1], [0], [0], [1], [0, 0, 1, 1], [], []>} : vector<16x32xf32>, vector<32x16xf32>, vector<16x16xf32> -> vector<16x16xf32>
    %5 = math.tanh %4 : vector<16x16xf32>
    %6 = vector.broadcast %2 : vector<1x16xf32> to vector<16x16xf32>
    %7 = arith.mulf %5, %6 : vector<16x16xf32>
    %8 = vector.shape_cast %7 : vector<16x16xf32> to vector<2x8x16xf32>
    %cst_6 = arith.constant dense<0.000000e+00> : vector<2x8xf32>
    %9 = vector.multi_reduction <add>, %8, %cst_6 [2] : vector<2x8x16xf32> to vector<2x8xf32>
    %10 = vector.shape_cast %9 : vector<2x8xf32> to vector<2x8x1xf32>
    %cst_7 = arith.constant dense<0xFF800000> : vector<2x1xf32>
    %11 = vector.multi_reduction <maximumf>, %10, %cst_7 [1] : vector<2x8x1xf32> to vector<2x1xf32>
    %12 = vector.shape_cast %11 : vector<2x1xf32> to vector<2x1x1xf32>
    %13 = vector.broadcast %12 : vector<2x1x1xf32> to vector<2x8x1xf32>
    %14 = arith.subf %10, %13 : vector<2x8x1xf32>
    %15 = math.exp %14 : vector<2x8x1xf32>
    %cst_8 = arith.constant dense<0.000000e+00> : vector<2x1xf32>
    %16 = vector.multi_reduction <add>, %15, %cst_8 [1] : vector<2x8x1xf32> to vector<2x1xf32>
    %17 = vector.shape_cast %16 : vector<2x1xf32> to vector<2x1x1xf32>
    %18 = tpu.reciprocal %17 {approx = true} : vector<2x1x1xf32> -> vector<2x1x1xf32>
    %19 = arith.mulf %17, %18 : vector<2x1x1xf32>
    %cst_9 = arith.constant 2.000000e+00 : f32
    %20 = vector.broadcast %cst_9 : f32 to vector<2x1x1xf32>
    %21 = arith.subf %20, %19 : vector<2x1x1xf32>
    %22 = arith.mulf %18, %21 : vector<2x1x1xf32>
    %23 = vector.broadcast %22 : vector<2x1x1xf32> to vector<2x8x1xf32>
    %24 = arith.mulf %15, %23 : vector<2x8x1xf32>
    %25 = vector.broadcast %24 : vector<2x8x1xf32> to vector<2x8x32xf32>
    %26 = arith.mulf %25, %0 : vector<2x8x32xf32>
    %cst_10 = arith.constant dense<0.000000e+00> : vector<2x32xf32>
    %27 = vector.multi_reduction <add>, %26, %cst_10 [1] : vector<2x8x32xf32> to vector<2x32xf32>
    %28 = vector.shape_cast %27 : vector<2x32xf32> to vector<2x1x32xf32>
    %c0_11 = arith.constant 0 : index
    %c0_12 = arith.constant 0 : index
    %c0_13 = arith.constant 0 : index
    %29 = vector.load %arg4[%c0_11, %c0_12, %c0_13] : memref<2x1x32xf32, #tpu.memory_space<vmem>>, vector<2x1x32xf32>
    tpu.vector_store %arg4[%c0_11, %c0_12, %c0_13], %28 {strides = array<i32>} : memref<2x1x32xf32, #tpu.memory_space<vmem>>, vector<2x1x32xf32>,
    %c0_14 = arith.constant 0 : index
    %c0_15 = arith.constant 0 : index
    %c0_16 = arith.constant 0 : index
    %30 = vector.load %arg5[%c0_14, %c0_15, %c0_16] : memref<2x8x1xf32, #tpu.memory_space<vmem>>, vector<2x8x1xf32>
    tpu.vector_store %arg5[%c0_14, %c0_15, %c0_16], %24 {strides = array<i32>} : memref<2x8x1xf32, #tpu.memory_space<vmem>>, vector<2x8x1xf32>,
    return
  }
  func.func @transform_0(%arg0: i32) -> (i32, i32, i32) {
    %c0_i32 = arith.constant 0 : i32
    %c0_i32_0 = arith.constant 0 : i32
    %c0_i32_1 = arith.constant 0 : i32
    return %arg0, %c0_i32, %c0_i32_0 : i32, i32, i32
  }
  func.func @transform_1(%arg0: i32) -> (i32, i32) {
    %c0_i32 = arith.constant 0 : i32
    %c0_i32_0 = arith.constant 0 : i32
    %c0_i32_1 = arith.constant 0 : i32
    return %c0_i32, %c0_i32_0 : i32, i32
  }
  func.func @transform_2(%arg0: i32) -> (i32, i32) {
    %c0_i32 = arith.constant 0 : i32
    %c0_i32_0 = arith.constant 0 : i32
    %c0_i32_1 = arith.constant 0 : i32
    return %c0_i32, %c0_i32_0 : i32, i32
  }
  func.func @transform_3(%arg0: i32) -> (i32, i32, i32) {
    %c0_i32 = arith.constant 0 : i32
    %c0_i32_0 = arith.constant 0 : i32
    %c0_i32_1 = arith.constant 0 : i32
    return %arg0, %c0_i32, %c0_i32_0 : i32, i32, i32
  }
  func.func @transform_4(%arg0: i32) -> (i32, i32, i32) {
    %c0_i32 = arith.constant 0 : i32
    %c0_i32_0 = arith.constant 0 : i32
    %c0_i32_1 = arith.constant 0 : i32
    return %arg0, %c0_i32, %c0_i32_0 : i32, i32, i32
  }
}

</mosaic_0001>

<llo_original>
// kernel: tpu_custom_call.1
$region0: #{tpu_custom_call.1}
  #allocation0 [shape = 'u32[]', space=smem, size = 0x4, offset = 0x4, fixed_abs, tag = 'smem constant byte address 0x4 - core index']
  #allocation1 [shape = 'u32[144,128]{1,0:T(1,128)}', space=vmem, size = 0x12000, scoped, tag = 'internal scratch']
  %s0 = inlined_call_operand.vmem [shape: f32[2,8,32], index: 0, kind: input, shape index: {}]
  %s1 = inlined_call_operand.vmem [shape: f32[32,16], index: 1, kind: input, shape index: {}]
  %s2 = inlined_call_operand.vmem [shape: f32[1,16], index: 2, kind: input, shape index: {}]
  %s3 = inlined_call_operand.hbm [shape: f32[2,1,32], index: 3, kind: output, shape index: {0}]
  %s4 = inlined_call_operand.vmem [shape: f32[2,8,1], index: 4, kind: output, shape index: {1}]
  %5 = xla_tuple %s3, %s4
  %s6 = sld [smem:[#allocation0]]
  $region30: #{tpu_custom_call.1} parent=0
    _
  %s8 = ssub.s32 1, %s6
  %s9 = scalar_select 0, %s8, %s6
  $region1: #{tpu_custom_call.1} parent=0
    #allocation2 [shape = 'u8[1024]{0}', space=vmem, size = 0x400, scoped, tag = 'output window, operand 0, single buffered']
    #allocation3 [shape = 's32[1]{0}', space=sflag, size = 0x4, scoped, tag = 'scoped memory for tpu_custom_call.1']
    %10 = vsyncpa [#allocation3], 0
    // Predicated region
    $region2: #{tpu_custom_call.1} parent=1 // pred_check
      _
    $region3: #{tpu_custom_call.1} parent=1 // pred_check_branch
      %12 = sbr.rel (0) target = $region5
    $region4: #{tpu_custom_call.1} parent=1 // pred_region
      _
    $region5: #{tpu_custom_call.1} parent=1 // pred_fallthru
      _
    // Predicated region
    $region6: #{tpu_custom_call.1} parent=1 // pred_check
      _
    $region7: #{tpu_custom_call.1} parent=1 // pred_check_branch
      %14 = sbr.rel (0) target = $region9
    $region8: #{tpu_custom_call.1} parent=1 // pred_region
      _
    $region9: #{tpu_custom_call.1} parent=1 // pred_fallthru
      _
    // Predicated region
    $region10: #{tpu_custom_call.1} parent=1 // pred_check
      _
    $region11: #{tpu_custom_call.1} parent=1 // pred_check_branch
      %16 = sbr.rel (0) target = $region13
    $region12: #{tpu_custom_call.1} parent=1 // pred_region
      _
    $region13: #{tpu_custom_call.1} parent=1 // pred_fallthru
      _
    %v17 = vld [vmem:[%s0] sm:$0xff]
    %v18 = vld [vmem:[%s0 + $0x8] sm:$0xff]
    %v19 = vld [vmem:[%s1] sm:$0xff]
    %v20 = vld [vmem:[%s1 + $0x8] sm:$0xff]
    %v21 = vld [vmem:[%s1 + $0x10] sm:$0xff]
    %v22 = vld [vmem:[%s1 + $0x18] sm:$0xff]
    %v23 = vld [vmem:[%s2] sm:$0x1]
    %vm24 = vcmask 261120
    %v26 = vsel %vm24, %v17, 0
    %v29 = vsel %vm24, %v18, 0
    %31 = vmatprep.subr.mxu0 0.0
    %32 = vmatpush1.msra.mxu0 %v19
    %33 = vmatprep.subr.mxu0 0.0
    %34 = vmatpush1.msra.mxu0 %v20
    %35 = vmatprep.subr.mxu0 0.0
    %36 = vmatpush1.msra.mxu0 %v21
    %37 = vmatprep.subr.mxu0 0.0
    %38 = vmatpush1.msra.mxu0 %v22
    %39 = vmatprep.subr.mxu0 0.0
    %40 = vmatpush1.msra.mxu0 0.0
    %41 = vmatprep.subr.mxu0 0.0
    %42 = vmatpush1.msra.mxu0 0.0
    %43 = vmatprep.subr.mxu0 0.0
    %44 = vmatpush1.msra.mxu0 0.0
    %45 = vmatprep.subr.mxu0 0.0
    %46 = vmatpush1.msra.mxu0 0.0
    %47 = vmatprep.subr.mxu0 0.0
    %48 = vmatpush1.msra.mxu0 0.0
    %49 = vmatprep.subr.mxu0 0.0
    %50 = vmatpush1.msra.mxu0 0.0
    %51 = vmatprep.subr.mxu0 0.0
    %52 = vmatpush1.msra.mxu0 0.0
    %53 = vmatprep.subr.mxu0 0.0
    %54 = vmatpush1.msra.mxu0 0.0
    %55 = vmatprep.subr.mxu0 0.0
    %56 = vmatpush1.msra.mxu0 0.0
    %57 = vmatprep.subr.mxu0 0.0
    %58 = vmatpush1.msra.mxu0 0.0
    %59 = vmatprep.subr.mxu0 0.0
    %60 = vmatpush1.msra.mxu0 0.0
    %61 = vmatprep.subr.mxu0 0.0
    %62 = vmatpush1.msra.mxu0 0.0
    %63 = vmatprep.subr.mxu0 0.0
    %64 = vmatpush1.msra.mxu0 0.0
    %65 = vmatprep.subr.mxu0 0.0
    %66 = vmatpush1.msra.mxu0 0.0
    %67 = vmatprep.subr.mxu0 0.0
    %68 = vmatpush1.msra.mxu0 0.0
    %69 = vmatprep.subr.mxu0 0.0
    %70 = vmatpush1.msra.mxu0 0.0
    %71 = vmatprep.subr.mxu0 0.0
    %72 = vmatpush1.msra.mxu0 0.0
    %73 = vmatprep.subr.mxu0 0.0
    %74 = vmatpush1.msra.mxu0 0.0
    %75 = vmatprep.subr.mxu0 0.0
    %76 = vmatpush1.msra.mxu0 0.0
    %77 = vmatprep.subr.mxu0 0.0
    %78 = vmatpush1.msra.mxu0 0.0
    %79 = vmatprep.subr.mxu0 0.0
    %80 = vmatpush1.msra.mxu0 0.0
    %81 = vmatprep.subr.mxu0 0.0
    %82 = vmatpush1.msra.mxu0 0.0
    %83 = vmatprep.subr.mxu0 0.0
    %84 = vmatpush1.msra.mxu0 0.0
    %85 = vmatprep.subr.mxu0 0.0
    %86 = vmatpush1.msra.mxu0 0.0
    %87 = vmatprep.subr.mxu0 0.0
    %88 = vmatpush1.msra.mxu0 0.0
    %89 = vmatprep.subr.mxu0 0.0
    %90 = vmatpush1.msra.mxu0 0.0
    %91 = vmatprep.subr.mxu0 0.0
    %92 = vmatpush1.msra.mxu0 0.0
    %93 = vmatprep.subr.mxu0 0.0
    %94 = vmatpush1.msra.mxu0 0.0
    %95 = vmatprep.mubr.f32.mxu0 0.0
    %96 = vmatmul.mubr.f32.gmra.mrb[0].mxu0 %v26
    %v97 = vpop.f32.mrb[0].mxu0
    %v98 = vadd.f32 0.0, %v97
    %v99 = vpop.f32.mrb[0].mxu0
    %100 = vmatprep.mubr.f32.mxu0 0.0
    %101 = vmatmul.mubr.f32.gmra.mrb[0].mxu0 %v29
    %v102 = vpop.f32.mrb[0].mxu0
    %v103 = vadd.f32 0.0, %v102
    %v104 = vpop.f32.mrb[0].mxu0
    %105 = vdwg.mxu0
    %v106 = vtanh.pop %v98
    %v107 = vtanh.pop %v103
    %v109 = vlaneseq
    %v110 = vshrl.u32 %v109, 7
    %v111 = vsub.s32 0, %v110
    %v112 = vrot.slane %v23, %v111
    %v114 = vmul.f32 %v106, %v112
    %v115 = vmul.f32 %v107, %v112
    %vm116 = vcmask 130048
    %v117 = vsel %vm116, %v114, 0.0
    %118 = vadd.xlane.f32.xlu0 %v117
    %v119 = vpop.xlane.xlu0 %118
    %v120 = vsel %vm116, %v115, 0.0
    %121 = vadd.xlane.f32.xlu0 %v120
    %v122 = vpop.xlane.xlu0 %121
    %v123 = vrot.slane %v119, 4
    %v124 = vmax.f32 %v119, %v123
    %v125 = vrot.slane %v124, 2
    %v126 = vmax.f32 %v124, %v125
    %v127 = vrot.slane %v126, 1
    %v128 = vmax.f32 %v126, %v127
    %v129 = vrot.slane %v122, 4
    %v130 = vmax.f32 %v122, %v129
    %v131 = vrot.slane %v130, 2
    %v132 = vmax.f32 %v130, %v131
    %v133 = vrot.slane %v132, 1
    %v134 = vmax.f32 %v132, %v133
    %v135 = vsub.f32 %v119, %v128
    %v136 = vsub.f32 %v122, %v134
    %v137 = vmul.f32 %v135, 1.442695
    %v138 = vpow.pop %v137
    %v139 = vmul.f32 %v136, 1.442695
    %v140 = vpow.pop %v139
    %v141 = vrot.slane %v138, 4
    %v142 = vadd.f32 %v138, %v141
    %v143 = vrot.slane %v142, 2
    %v144 = vadd.f32 %v142, %v143
    %v145 = vrot.slane %v144, 1
    %v146 = vadd.f32 %v144, %v145
    %v147 = vrot.slane %v140, 4
    %v148 = vadd.f32 %v140, %v147
    %v149 = vrot.slane %v148, 2
    %v150 = vadd.f32 %v148, %v149
    %v151 = vrot.slane %v150, 1
    %v152 = vadd.f32 %v150, %v151
    %v153 = vrcp.pop %v146
    %v154 = vrcp.pop %v152
    %v155 = vmul.f32 %v146, %v153
    %v156 = vmul.f32 %v152, %v154
    %v157 = vsub.f32 2.0, %v155
    %v158 = vsub.f32 2.0, %v156
    %v159 = vmul.f32 %v153, %v157
    %v160 = vmul.f32 %v154, %v158
    %v161 = vmul.f32 %v138, %v159
    %v162 = vmul.f32 %v140, %v160
    %v163 = vmul.f32 %v161, %v17
    %v164 = vmul.f32 %v162, %v18
    %v165 = vsel %vm24, %v163, 0.0
    %v166 = vrot.slane %v165, 4
    %v167 = vadd.f32 %v165, %v166
    %v168 = vrot.slane %v167, 2
    %v169 = vadd.f32 %v167, %v168
    %v170 = vrot.slane %v169, 1
    %v171 = vadd.f32 %v169, %v170
    %v172 = vsel %vm24, %v164, 0.0
    %v173 = vrot.slane %v172, 4
    %v174 = vadd.f32 %v172, %v173
    %v175 = vrot.slane %v174, 2
    %v176 = vadd.f32 %v174, %v175
    %v177 = vrot.slane %v176, 1
    %v178 = vadd.f32 %v176, %v177
    %vm179 = vcmask 253952
    %180 = vst.msk [vmem:[#allocation2] sm:$0x1] %vm179, %v171
    %181 = vst.msk [vmem:[#allocation2 + $0x1] sm:$0x1] %vm179, %v178
    %vm182 = vcmask 7168
    %183 = vst.msk [vmem:[%s4] sm:$0xff] %vm182, %v161
    %184 = vst.msk [vmem:[%s4 + $0x8] sm:$0xff] %vm182, %v162
    // Predicated region
    $region14: #{tpu_custom_call.1} parent=1 // pred_check
      _
    $region15: #{tpu_custom_call.1} parent=1 // pred_check_branch
      %186 = sbr.rel (0) target = $region17
    $region16: #{tpu_custom_call.1} parent=1 // pred_region
      %s188 = ssub.s32 32, 32
      %189 = vsyncadd [#allocation3], %s188
      %s190 = sshll.u32 [#allocation2], 4
      %s191 = int_to_ptr.vmem [resolvable:$true] %s190
      %196 = dma.vmem_to_hbm [thread:$0]  %s191, 32, %s3, [#allocation3], 16, 16, 1
    $region17: #{tpu_custom_call.1} parent=1 // pred_fallthru
      _
    // Predicated region
    $region18: #{tpu_custom_call.1} parent=1 // pred_check
      _
    $region19: #{tpu_custom_call.1} parent=1 // pred_check_branch
      %198 = sbr.rel (0) target = $region21
    $region20: #{tpu_custom_call.1} parent=1 // pred_region
      _
    $region21: #{tpu_custom_call.1} parent=1 // pred_fallthru
      _
    // Predicated region
    $region22: #{tpu_custom_call.1} parent=1 // pred_check
      _
    $region23: #{tpu_custom_call.1} parent=1 // pred_check_branch
      %200 = sbr.rel (0) target = $region25
    $region24: #{tpu_custom_call.1} parent=1 // pred_region
      %201 = dma.done [#allocation3], 32
    $region25: #{tpu_custom_call.1} parent=1 // pred_fallthru
      _
    // Predicated region
    $region26: #{tpu_custom_call.1} parent=1 // pred_check
      _
    $region27: #{tpu_custom_call.1} parent=1 // pred_check_branch
      %203 = sbr.rel (0) target = $region29
    $region28: #{tpu_custom_call.1} parent=1 // pred_region
      _
    $region29: #{tpu_custom_call.1} parent=1 // pred_fallthru
      _
    %204 = vsyncpa [#allocation3], 1

</llo_original>
